<compile_context>
chip_gen: v5e
topology: v5e:2x2
jax: 0.10.0
libtpu: 0.0.40
codegen_flags: <defaults>
</compile_context>

<pallas_src>
import jax
import jax.numpy as jnp
from jax.experimental import pallas as pl
from jax.experimental.pallas import tpu as pltpu


def _concat_kernel(score_ref, boxes_ref, out_ref):
    # Build the full (tile_n, c_score + c_boxes) tile in-register and store it
    # once with an unmasked full-block store.
    out_ref[...] = jnp.concatenate([score_ref[...], boxes_ref[...]], axis=1)


def _pick_row_tile(n: int, itemsize: int, max_tile: int = 2048) -> int:
    """Row tile: multiple of 8, capped so 3 arrays x 2 buffers x lane-padded
    (128) tiles stay a small fraction of VMEM even on v7x."""
    if n <= max_tile:
        return n  # full-extent block (degenerate grid) — always legal.
    # Per-buffer bytes ~= tile * 128 * itemsize; 3 arrays * 2 buffers.
    # max_tile=2048, f32  ->  3 * 2 * 1 MiB = 6 MiB  << 64 MiB (v7x).
    tile = max_tile
    while tile % 8 != 0:
        tile -= 1
    return tile


def merge_nms_outputs(cat_score: jax.Array, cat_boxes: jax.Array) -> jax.Array:
    """Equivalent of torch.cat([cat_score, cat_boxes], dim=1)."""
    assert cat_score.ndim == 2 and cat_boxes.ndim == 2
    assert cat_score.shape[0] == cat_boxes.shape[0], "batch (dim 0) must match"

    # torch.cat type-promotes mixed numeric dtypes; mirror that here.
    dtype = jnp.result_type(cat_score.dtype, cat_boxes.dtype)
    cat_score = cat_score.astype(dtype)
    cat_boxes = cat_boxes.astype(dtype)

    n, c_score = cat_score.shape
    c_boxes = cat_boxes.shape[1]
    c_out = c_score + c_boxes
    itemsize = jnp.dtype(dtype).itemsize

    block_n = _pick_row_tile(n, itemsize)
    grid = (pl.cdiv(n, block_n),)

    # Pure copy: read score + boxes, write concat.
    cost = pl.CostEstimate(
        flops=0,
        transcendentals=0,
        bytes_accessed=2 * n * c_out * itemsize,
    )

    return pl.pallas_call(
        _concat_kernel,
        out_shape=jax.ShapeDtypeStruct((n, c_out), dtype),
        grid=grid,
        in_specs=[
            pl.BlockSpec((block_n, c_score), lambda i: (i, 0)),
            pl.BlockSpec((block_n, c_boxes), lambda i: (i, 0)),
        ],
        out_specs=pl.BlockSpec((block_n, c_out), lambda i: (i, 0)),
        compiler_params=pltpu.CompilerParams(
            # Row tiles are independent -> shard across TCs on v7x megacore.
            dimension_semantics=("parallel",),
        ),
        cost_estimate=cost,
    )(cat_score, cat_boxes)


if __name__ == "__main__":
    key = jax.random.PRNGKey(0)
    k1, k2, k3, k4 = jax.random.split(key, 4)

    # Small shapes consistent with palm-detection post-processing:
    # N detections, 1 score column, 18 box/keypoint columns.
    N, C_SCORE, C_BOXES = 16, 1, 18
    cat_score = jax.random.uniform(k1, (N, C_SCORE), dtype=jnp.float32)
    cat_boxes = jax.random.uniform(k2, (N, C_BOXES), dtype=jnp.float32)

    out = merge_nms_outputs(cat_score, cat_boxes)
    out = jax.block_until_ready(out)

    ref = jnp.concatenate([cat_score, cat_boxes], axis=1)
    assert out.shape == (N, C_SCORE + C_BOXES)
    assert out.dtype == cat_score.dtype
    assert jnp.array_equal(out, ref)

    # Also exercise the tiled (grid > 1) path, including a ragged last tile.
    N2 = 2048 + 24
    s2 = jax.random.uniform(k3, (N2, C_SCORE), dtype=jnp.float32)
    b2 = jax.random.uniform(k4, (N2, C_BOXES), dtype=jnp.float32)
    out2 = jax.block_until_ready(merge_nms_outputs(s2, b2))
    ref2 = jnp.concatenate([s2, b2], axis=1)
    assert jnp.array_equal(out2, ref2)

    print("KERNEL_OK")
</pallas_src>

<mosaic_0001>
module attributes {stable_mosaic.version = 11 : i64} {
  func.func @_concat_kernel(%arg0: i32, %arg1: memref<16x1xf32, #tpu.memory_space<vmem>>, %arg2: memref<16x18xf32, #tpu.memory_space<vmem>>, %arg3: memref<16x19xf32, #tpu.memory_space<vmem>>) attributes {dimension_semantics = [#tpu.dimension_semantics<parallel>], iteration_bounds = array<i64: 1>, scalar_prefetch = 0 : i64, scratch_operands = 0 : i64, tpu.core_type = #tpu.core_type<tc>, window_params = [{transform_indices = @transform_0, window_bounds = array<i64: 16, 1>}, {transform_indices = @transform_1, window_bounds = array<i64: 16, 18>}, {transform_indices = @transform_2, window_bounds = array<i64: 16, 19>}]} {
    %c0 = arith.constant 0 : index
    %c0_0 = arith.constant 0 : index
    %0 = vector.load %arg1[%c0, %c0_0] : memref<16x1xf32, #tpu.memory_space<vmem>>, vector<16x1xf32>
    %c0_1 = arith.constant 0 : index
    %c0_2 = arith.constant 0 : index
    %1 = vector.load %arg2[%c0_1, %c0_2] : memref<16x18xf32, #tpu.memory_space<vmem>>, vector<16x18xf32>
    %2 = tpu.concatenate %0, %1 in 1 : vector<16x1xf32>, vector<16x18xf32> -> vector<16x19xf32>
    %c0_3 = arith.constant 0 : index
    %c0_4 = arith.constant 0 : index
    %3 = vector.load %arg3[%c0_3, %c0_4] : memref<16x19xf32, #tpu.memory_space<vmem>>, vector<16x19xf32>
    tpu.vector_store %arg3[%c0_3, %c0_4], %2 {strides = array<i32>} : memref<16x19xf32, #tpu.memory_space<vmem>>, vector<16x19xf32>,
    return
  }
  func.func @transform_0(%arg0: i32) -> (i32, i32) {
    %c0_i32 = arith.constant 0 : i32
    %c0_i32_0 = arith.constant 0 : i32
    return %arg0, %c0_i32 : i32, i32
  }
  func.func @transform_1(%arg0: i32) -> (i32, i32) {
    %c0_i32 = arith.constant 0 : i32
    %c0_i32_0 = arith.constant 0 : i32
    return %arg0, %c0_i32 : i32, i32
  }
  func.func @transform_2(%arg0: i32) -> (i32, i32) {
    %c0_i32 = arith.constant 0 : i32
    %c0_i32_0 = arith.constant 0 : i32
    return %arg0, %c0_i32 : i32, i32
  }
}

</mosaic_0001>

<llo_original>
// kernel: tpu_custom_call.1
$region0: #{tpu_custom_call.1}
  #allocation0 [shape = 'u32[]', space=smem, size = 0x4, offset = 0x4, fixed_abs, tag = 'smem constant byte address 0x4 - core index']
  #allocation1 [shape = 'u32[72,128]{1,0:T(1,128)}', space=vmem, size = 0x9000, scoped, tag = 'internal scratch']
  %s0 = inlined_call_operand.vmem [shape: f32[16,1], index: 0, kind: input, shape index: {}]
  %s1 = inlined_call_operand.vmem [shape: f32[16,18], index: 1, kind: input, shape index: {}]
  %s2 = inlined_call_operand.hbm [shape: f32[16,19], index: 2, kind: output, shape index: {}]
  %s3 = sld [smem:[#allocation0]]
  $region18: #{tpu_custom_call.1} parent=0
    _
  %s5 = ssub.s32 1, %s3
  %s6 = scalar_select 0, %s5, %s3
  $region1: #{tpu_custom_call.1} parent=0
    #allocation2 [shape = 'u8[8192]{0}', space=vmem, size = 0x2000, scoped, tag = 'output window, operand 0, single buffered']
    #allocation3 [shape = 's32[1]{0}', space=sflag, size = 0x4, scoped, tag = 'scoped memory for tpu_custom_call.1']
    %7 = vsyncpa [#allocation3], 0
    // Predicated region
    $region2: #{tpu_custom_call.1} parent=1 // pred_check
      _
    $region3: #{tpu_custom_call.1} parent=1 // pred_check_branch
      %9 = sbr.rel (0) target = $region5
    $region4: #{tpu_custom_call.1} parent=1 // pred_region
      _
    $region5: #{tpu_custom_call.1} parent=1 // pred_fallthru
      _
    // Predicated region
    $region6: #{tpu_custom_call.1} parent=1 // pred_check
      _
    $region7: #{tpu_custom_call.1} parent=1 // pred_check_branch
      %11 = sbr.rel (0) target = $region9
    $region8: #{tpu_custom_call.1} parent=1 // pred_region
      _
    $region9: #{tpu_custom_call.1} parent=1 // pred_fallthru
      _
    %v12 = vld [vmem:[%s0] sm:$0xff]
    %v13 = vld [vmem:[%s0 + $0x8] sm:$0xff]
    %v14 = vld [vmem:[%s1] sm:$0xff]
    %v15 = vld [vmem:[%s1 + $0x8] sm:$0xff]
    %18 = vrot.lane.b32.xlu0 %v14, 1
    %v19 = vpop.permute.xlu0 %18
    %20 = vrot.lane.b32.xlu0 %v15, 1
    %v21 = vpop.permute.xlu0 %20
    %vm24 = vcmask 7168
    %v25 = vsel %vm24, %v12, %v19
    %v26 = vsel %vm24, %v13, %v21
    %vm27 = vcmask 154624
    %28 = vst.msk [vmem:[#allocation2] sm:$0xff] %vm27, %v25
    %29 = vst.msk [vmem:[#allocation2 + $0x8] sm:$0xff] %vm27, %v26
    // Predicated region
    $region10: #{tpu_custom_call.1} parent=1 // pred_check
      _
    $region11: #{tpu_custom_call.1} parent=1 // pred_check_branch
      %31 = sbr.rel (0) target = $region13
    $region12: #{tpu_custom_call.1} parent=1 // pred_region
      %33 = vsyncadd [#allocation3], 0
      %s34 = sshll.u32 [#allocation2], 4
      %s35 = int_to_ptr.vmem [resolvable:$true] %s34
      %s36 = sshll.u32 %s2, 4
      %s37 = int_to_ptr.hbm [resolvable:$true] %s36
      %42 = dma.vmem_to_hbm [thread:$0]  %s35, 256, %s37, [#allocation3], 128, 128, 8
    $region13: #{tpu_custom_call.1} parent=1 // pred_fallthru
      _
    // Predicated region
    $region14: #{tpu_custom_call.1} parent=1 // pred_check
      _
    $region15: #{tpu_custom_call.1} parent=1 // pred_check_branch
      %44 = sbr.rel (0) target = $region17
    $region16: #{tpu_custom_call.1} parent=1 // pred_region
      %46 = dma.done [#allocation3], 256
    $region17: #{tpu_custom_call.1} parent=1 // pred_fallthru
      _
    %47 = vsyncpa [#allocation3], 1

</llo_original>
